<compile_context>
chip_gen: v7x
topology: tpu7x:2x2x1
jax: 0.10.0
libtpu: 0.0.40
codegen_flags: <defaults>
</compile_context>

<pallas_src>
import jax
import jax.numpy as jnp
from jax.experimental import pallas as pl
from jax.experimental.pallas import tpu as pltpu


def _pu_forward_kernel(x_ref, noise_ref, w1_ref, b1_ref, w2_ref, b2_ref, out_ref):
    """Fused mu/std MLPs + sampling from the predictive distribution."""
    x = x_ref[...]                                               # (TB, F)

    # Fused first layer of both predictors: one MXU pass, one ReLU.
    h = jnp.maximum(
        jnp.dot(x, w1_ref[...], preferred_element_type=jnp.float32)
        + b1_ref[...],
        0.0)                                                     # (TB, 2H)

    # Packed block-diagonal second layer: col 0 = mu, col 1 = log sigma^2.
    ml = jnp.dot(h, w2_ref[...], preferred_element_type=jnp.float32)  # (TB, 2)
    mu = ml[:, 0:1] + b2_ref[0]                                  # (TB, 1)
    logv = ml[:, 1:2] + b2_ref[1]                                # (TB, 1)

    # mean + noise * exp(0.5 * log sigma^2), broadcast over the sample lanes.
    out_ref[...] = mu + noise_ref[...] * jnp.exp(0.5 * logv)     # (TB, S_pad)


def predictive_uncertainty_forward(x, noise, params, *, block_b=128):
    """x: (B, F) pair features; noise: (B, S) standard-normal samples."""
    B, F = x.shape
    S = noise.shape[1]
    H = params["w1m"].shape[1]
    H2 = 2 * H

    # --- fuse/pack parameters (cheap, wrapper-side, once per call) ---
    w1_cat = jnp.concatenate([params["w1m"], params["w1s"]], axis=1)    # (F, 2H)
    b1_cat = jnp.concatenate([params["b1m"], params["b1s"]], axis=1)    # (1, 2H)
    w2_cat = jnp.zeros((H2, 2), jnp.float32)
    w2_cat = w2_cat.at[:H, 0].set(params["w2m"][0])
    w2_cat = w2_cat.at[H:, 1].set(params["w2s"][0])                     # (2H, 2)
    b2_cat = jnp.stack([params["b2m"][0, 0], params["b2s"][0, 0]])      # (2,)

    # --- lane-dense sample dim: pad S up to a multiple of 128 ---
    S_pad = ((S + 127) // 128) * 128
    noise_p = noise if S_pad == S else jnp.pad(noise, ((0, 0), (0, S_pad - S)))

    # --- batch tiling (TB rows per grid step, batch padded to a multiple) ---
    TB = block_b if B >= block_b else ((B + 7) // 8) * 8
    B_pad = ((B + TB - 1) // TB) * TB
    x_p = x if B_pad == B else jnp.pad(x, ((0, B_pad - B), (0, 0)))
    if B_pad != B:
        noise_p = jnp.pad(noise_p, ((0, B_pad - B), (0, 0)))
    grid = (B_pad // TB,)

    flops = 2 * B_pad * F * H2 + 2 * B_pad * H2 * 2 + 2 * B_pad * S_pad
    bytes_accessed = 4 * (B_pad * F + 2 * B_pad * S_pad
                          + F * H2 + H2 + H2 * 2 + 2)
    cost = pl.CostEstimate(flops=int(flops),
                           transcendentals=int(B_pad),
                           bytes_accessed=int(bytes_accessed))

    out = pl.pallas_call(
        _pu_forward_kernel,
        out_shape=jax.ShapeDtypeStruct((B_pad, S_pad), jnp.float32),
        grid=grid,
        in_specs=[
            pl.BlockSpec((TB, F), lambda i: (i, 0)),          # x tile
            pl.BlockSpec((TB, S_pad), lambda i: (i, 0)),      # noise tile
            pl.BlockSpec((F, H2), lambda i: (0, 0)),          # fused W1 (resident)
            pl.BlockSpec((1, H2), lambda i: (0, 0)),          # fused b1 (resident)
            pl.BlockSpec((H2, 2), lambda i: (0, 0)),          # packed W2 (resident)
            pl.BlockSpec(memory_space=pltpu.MemorySpace.SMEM),  # b2 scalars
        ],
        out_specs=pl.BlockSpec((TB, S_pad), lambda i: (i, 0)),
        compiler_params=pltpu.CompilerParams(
            dimension_semantics=("parallel",),
            vmem_limit_bytes=32 * 1024 * 1024,
        ),
        cost_estimate=cost,
    )(x_p, noise_p, w1_cat, b1_cat, w2_cat, b2_cat)

    return out[:B, :S]


def _reference_forward(x, noise, p):
    hm = jnp.maximum(x @ p["w1m"] + p["b1m"], 0.0)
    mu = hm @ p["w2m"].T + p["b2m"]
    hs = jnp.maximum(x @ p["w1s"] + p["b1s"], 0.0)
    logv = hs @ p["w2s"].T + p["b2s"]
    return mu + noise * jnp.exp(0.5 * logv)


if __name__ == "__main__":
    key = jax.random.PRNGKey(0)
    n_drugs, d_feat = 10, 16          # `data`: per-drug feature matrix
    B, H, S = 200, 32, 100            # drug-pair batch, hidden dim, 100 samples
    F = 2 * d_feat                    # predictor_layers = [F, H, 1]

    ks = jax.random.split(key, 8)
    data = jax.random.normal(ks[0], (n_drugs, d_feat), jnp.float32)
    idx1 = jax.random.randint(ks[1], (B,), 0, n_drugs)
    idx2 = jax.random.randint(ks[2], (B,), 0, n_drugs)
    scores = jax.random.normal(ks[3], (B,), jnp.float32)
    drug_drug_batch = (idx1, idx2, scores)

    def init_mlp(k):
        k1, k2 = jax.random.split(k, 2)
        w1 = jax.random.normal(k1, (F, H), jnp.float32) / jnp.sqrt(jnp.float32(F))
        b1 = jnp.zeros((1, H), jnp.float32)
        w2 = jax.random.normal(k2, (1, H), jnp.float32) / jnp.sqrt(jnp.float32(H))
        b2 = jnp.zeros((1, 1), jnp.float32)
        return w1, b1, w2, b2

    w1m, b1m, w2m, b2m = init_mlp(ks[4])   # mu_predictor params
    w1s, b1s, w2s, b2s = init_mlp(ks[5])   # std_predictor params
    params = dict(w1m=w1m, b1m=b1m, w2m=w2m, b2m=b2m,
                  w1s=w1s, b1s=b1s, w2s=w2s, b2s=b2s)

    # Glue (plain JAX): gather + concat the two drugs' features for each pair.
    # TODO(synk): fold this gather+concat into the kernel via scalar-prefetched
    # idx1/idx2 (PrefetchScalarGridSpec) to avoid materializing x in HBM at
    # large B; kept in XLA here for robustness.
    x = jnp.concatenate(
        [data[drug_drug_batch[0]], data[drug_drug_batch[1]]], axis=1)  # (B, F)

    # torch.randn((len(mean_prediction), 100)) -> deterministic JAX normal draw.
    noise = jax.random.normal(ks[6], (B, S), jnp.float32)

    out = predictive_uncertainty_forward(x, noise, params)
    out = jax.block_until_ready(out)

    assert out.shape == (B, S) and out.dtype == jnp.float32
    ref = _reference_forward(x, noise, params)
    assert jnp.allclose(out, ref, atol=2e-5, rtol=2e-5)
    print("KERNEL_OK")
</pallas_src>

<mosaic_0001>
module attributes {stable_mosaic.version = 11 : i64} {
  func.func @_pu_forward_kernel(%arg0: i32, %arg1: memref<128x32xf32, #tpu.memory_space<vmem>>, %arg2: memref<128x128xf32, #tpu.memory_space<vmem>>, %arg3: memref<32x64xf32, #tpu.memory_space<vmem>>, %arg4: memref<1x64xf32, #tpu.memory_space<vmem>>, %arg5: memref<64x2xf32, #tpu.memory_space<vmem>>, %arg6: memref<2xf32, #tpu.memory_space<smem>>, %arg7: memref<128x128xf32, #tpu.memory_space<vmem>>) attributes {dimension_semantics = [#tpu.dimension_semantics<parallel>], iteration_bounds = array<i64: 2>, scalar_prefetch = 0 : i64, scratch_operands = 0 : i64, tpu.core_type = #tpu.core_type<tc>, window_params = [{transform_indices = @transform_0, window_bounds = array<i64: 128, 32>}, {transform_indices = @transform_1, window_bounds = array<i64: 128, 128>}, {pipeline_mode = #tpu.pipeline_mode<synchronous>, transform_indices = @transform_2, window_bounds = array<i64: 32, 64>}, {pipeline_mode = #tpu.pipeline_mode<synchronous>, transform_indices = @transform_3, window_bounds = array<i64: 1, 64>}, {pipeline_mode = #tpu.pipeline_mode<synchronous>, transform_indices = @transform_4, window_bounds = array<i64: 64, 2>}, {transform_indices = @transform_5, window_bounds = array<i64: 2>}, {transform_indices = @transform_6, window_bounds = array<i64: 128, 128>}]} {
    %c0 = arith.constant 0 : index
    %c0_0 = arith.constant 0 : index
    %0 = vector.load %arg1[%c0, %c0_0] : memref<128x32xf32, #tpu.memory_space<vmem>>, vector<128x32xf32>
    %c0_1 = arith.constant 0 : index
    %c0_2 = arith.constant 0 : index
    %1 = vector.load %arg3[%c0_1, %c0_2] : memref<32x64xf32, #tpu.memory_space<vmem>>, vector<32x64xf32>
    %cst = arith.constant dense<0.000000e+00> : vector<128x64xf32>
    %2 = tpu.matmul %0, %1, %cst {dimension_numbers = #tpu.dot_dimension_numbers<[1], [0], [0], [1], [0, 0, 1, 1], [], []>} : vector<128x32xf32>, vector<32x64xf32>, vector<128x64xf32> -> vector<128x64xf32>
    %c0_3 = arith.constant 0 : index
    %c0_4 = arith.constant 0 : index
    %3 = vector.load %arg4[%c0_3, %c0_4] : memref<1x64xf32, #tpu.memory_space<vmem>>, vector<1x64xf32>
    %4 = vector.broadcast %3 : vector<1x64xf32> to vector<128x64xf32>
    %5 = arith.addf %2, %4 : vector<128x64xf32>
    %cst_5 = arith.constant 0.000000e+00 : f32
    %6 = vector.broadcast %cst_5 : f32 to vector<128x64xf32>
    %7 = arith.maximumf %5, %6 : vector<128x64xf32>
    %c0_6 = arith.constant 0 : index
    %c0_7 = arith.constant 0 : index
    %8 = vector.load %arg5[%c0_6, %c0_7] : memref<64x2xf32, #tpu.memory_space<vmem>>, vector<64x2xf32>
    %cst_8 = arith.constant dense<0.000000e+00> : vector<128x2xf32>
    %9 = tpu.matmul %7, %8, %cst_8 {dimension_numbers = #tpu.dot_dimension_numbers<[1], [0], [0], [1], [0, 0, 1, 1], [], []>} : vector<128x64xf32>, vector<64x2xf32>, vector<128x2xf32> -> vector<128x2xf32>
    %10 = vector.extract_strided_slice %9 {offsets = [0, 0], sizes = [128, 1], strides = [1, 1]} : vector<128x2xf32> to vector<128x1xf32>
    %c0_9 = arith.constant 0 : index
    %11 = memref.load %arg6[%c0_9] : memref<2xf32, #tpu.memory_space<smem>>
    %12 = vector.broadcast %11 : f32 to vector<128x1xf32>
    %13 = arith.addf %10, %12 : vector<128x1xf32>
    %14 = vector.extract_strided_slice %9 {offsets = [0, 1], sizes = [128, 1], strides = [1, 1]} : vector<128x2xf32> to vector<128x1xf32>
    %c1 = arith.constant 1 : index
    %15 = memref.load %arg6[%c1] : memref<2xf32, #tpu.memory_space<smem>>
    %16 = vector.broadcast %15 : f32 to vector<128x1xf32>
    %17 = arith.addf %14, %16 : vector<128x1xf32>
    %c0_10 = arith.constant 0 : index
    %c0_11 = arith.constant 0 : index
    %18 = vector.load %arg2[%c0_10, %c0_11] : memref<128x128xf32, #tpu.memory_space<vmem>>, vector<128x128xf32>
    %cst_12 = arith.constant 5.000000e-01 : f32
    %19 = vector.broadcast %cst_12 : f32 to vector<128x1xf32>
    %20 = arith.mulf %19, %17 : vector<128x1xf32>
    %21 = math.exp %20 : vector<128x1xf32>
    %22 = vector.broadcast %21 : vector<128x1xf32> to vector<128x128xf32>
    %23 = arith.mulf %18, %22 : vector<128x128xf32>
    %24 = vector.broadcast %13 : vector<128x1xf32> to vector<128x128xf32>
    %25 = arith.addf %24, %23 : vector<128x128xf32>
    %c0_13 = arith.constant 0 : index
    %c0_14 = arith.constant 0 : index
    %26 = vector.load %arg7[%c0_13, %c0_14] : memref<128x128xf32, #tpu.memory_space<vmem>>, vector<128x128xf32>
    tpu.vector_store %arg7[%c0_13, %c0_14], %25 {strides = array<i32>} : memref<128x128xf32, #tpu.memory_space<vmem>>, vector<128x128xf32>,
    return
  }
  func.func @transform_0(%arg0: i32) -> (i32, i32) {
    %c0_i32 = arith.constant 0 : i32
    %c0_i32_0 = arith.constant 0 : i32
    return %arg0, %c0_i32 : i32, i32
  }
  func.func @transform_1(%arg0: i32) -> (i32, i32) {
    %c0_i32 = arith.constant 0 : i32
    %c0_i32_0 = arith.constant 0 : i32
    return %arg0, %c0_i32 : i32, i32
  }
  func.func @transform_2(%arg0: i32) -> (i32, i32) {
    %c0_i32 = arith.constant 0 : i32
    %c0_i32_0 = arith.constant 0 : i32
    %c0_i32_1 = arith.constant 0 : i32
    return %c0_i32, %c0_i32_0 : i32, i32
  }
  func.func @transform_3(%arg0: i32) -> (i32, i32) {
    %c0_i32 = arith.constant 0 : i32
    %c0_i32_0 = arith.constant 0 : i32
    %c0_i32_1 = arith.constant 0 : i32
    return %c0_i32, %c0_i32_0 : i32, i32
  }
  func.func @transform_4(%arg0: i32) -> (i32, i32) {
    %c0_i32 = arith.constant 0 : i32
    %c0_i32_0 = arith.constant 0 : i32
    %c0_i32_1 = arith.constant 0 : i32
    return %c0_i32, %c0_i32_0 : i32, i32
  }
  func.func @transform_5(%arg0: i32) -> i32 {
    %c0_i32 = arith.constant 0 : i32
    %c0_i32_0 = arith.constant 0 : i32
    return %c0_i32 : i32
  }
  func.func @transform_6(%arg0: i32) -> (i32, i32) {
    %c0_i32 = arith.constant 0 : i32
    %c0_i32_0 = arith.constant 0 : i32
    return %arg0, %c0_i32 : i32, i32
  }
}

</mosaic_0001>

<llo_original>
// kernel: tpu_custom_call.1
$region0: #{tpu_custom_call.1}
  #allocation0 [shape = 'u32[]', space=smem, size = 0x4, offset = 0x4, fixed_abs, tag = 'smem constant byte address 0x4 - core index']
  #allocation1 [shape = 'u32[144,128]{1,0:T(1,128)}', space=vmem, size = 0x12000, scoped, tag = 'internal scratch']
  %s0 = inlined_call_operand.vmem [shape: f32[256,32], index: 0, kind: input, shape index: {}]
  %s1 = inlined_call_operand.vmem [shape: f32[256,128], index: 1, kind: input, shape index: {}]
  %s2 = inlined_call_operand.vmem [shape: f32[32,64], index: 2, kind: input, shape index: {}]
  %s3 = inlined_call_operand.vmem [shape: f32[1,64], index: 3, kind: input, shape index: {}]
  %s4 = inlined_call_operand.vmem [shape: f32[64,2], index: 4, kind: input, shape index: {}]
  %s5 = inlined_call_operand.vmem [shape: f32[2], index: 5, kind: input, shape index: {}]
  %s6 = inlined_call_operand.hbm [shape: f32[256,128], index: 6, kind: output, shape index: {}]
  %s7 = sld [smem:[#allocation0]]
  $region61: #{tpu_custom_call.1} parent=0
    _
  %s9 = ssub.s32 1, %s7
  %s10 = scalar_select 0, %s9, %s7
  $region1: #{tpu_custom_call.1} parent=0
    #allocation2 [shape = 'u8[512]{0}', space=smem, size = 0x200, scoped, tag = 'input window, operand 5, single buffered']
    #allocation3 [shape = 's32[2]{0}', space=sflag, size = 0x8, scoped, tag = 'scoped memory for tpu_custom_call.1']
    #allocation4 [shape = 's32[2]{0}', space=sflag, size = 0x8, scoped, tag = 'scoped memory for tpu_custom_call.1']
    #allocation5 [shape = 'u8[131072]{0}', space=vmem, size = 0x20000, scoped, tag = 'output window, operand 0']
    %11 = vsyncpa [#allocation4], 0
    %12 = vsyncpa [#allocation3], 0
    %s13 = scalar_lea.sflag [#allocation3], 1
    %14 = vsyncpa %s13, 0
    loop: start=0, step=1, limit=4
    $region2: #{tpu_custom_call.1} parent=1 // loop_pre_header
      _
    $region3: #{tpu_custom_call.1} parent=1 // loop_header
      %s16 = sphi 0, %s20
      %p17 = scmp.ge.s32.totalorder %s16, 4
      %s26 = sphi 0, %s28
      %s29 = sphi 0, %s26
      %s30 = sphi 0, %s29
      %s46 = sphi 0, %s30
      %s52 = sphi 0, %s54
      %s55 = sphi 0, %s52
      %s56 = sphi 0, %s55
      %s72 = sphi 0, %s56
      %s76 = sphi 0, %s76
      %s78 = sphi 0, %s76
      %s79 = sphi 0, %s78
      %s93 = sphi 0, %s79
      %s97 = sphi 0, %s97
      %s99 = sphi 0, %s97
      %s100 = sphi 0, %s99
      %s114 = sphi 0, %s100
      %s118 = sphi 0, %s118
      %s120 = sphi 0, %s118
      %s121 = sphi 0, %s120
      %s135 = sphi 0, %s121
      %s139 = sphi 0, %s139
      %s141 = sphi 0, %s139
      %s142 = sphi 0, %s141
      %s156 = sphi 0, %s142
      %s162 = sphi 0, %s164
      %s165 = sphi 0, %s162
      %s166 = sphi 0, %s165
      %s182 = sphi 0, %s166
    $region4: #{tpu_custom_call.1} parent=1 // loop_header_branch
      %19 = sbr.rel (%p17) target = $region8
    $region5: #{tpu_custom_call.1} parent=1 // loop_body
      %s21 = ssub.s32 %s16, 1
      %s22 = ssub.s32 %s16, 2
      %s23 = sadd.s32 %s16, 1
      %s24 = ssub.s32 %s16, %s23
      %p25 = scmp.eq.s32.totalorder %s24, 0
      %s27 = sadd.s32 %s26, 1
      %s28 = scalar_select %p25, %s26, %s27
      %p31 = pneg %p25
      %p32 = scmp.eq.s32.totalorder %s16, 1
      %p33 = por %p31, %p32
      %p34 = scmp.ne.s32.totalorder %s26, %s29
      %p35 = scmp.eq.s32.totalorder %s16, 0
      %p36 = por %p34, %p35
      %p37 = scmp.ne.s32.totalorder %s26, %s29
      %p38 = scmp.eq.s32.totalorder %s21, 1
      %p39 = por %p37, %p38
      %p40 = scmp.ne.s32.totalorder %s29, %s30
      %p41 = scmp.eq.s32.totalorder %s21, 0
      %p42 = por %p40, %p41
      %p43 = scmp.ne.s32.totalorder %s29, %s30
      %p44 = scmp.eq.s32.totalorder %s22, 1
      %p45 = por %p43, %p44
      %p47 = scmp.ne.s32.totalorder %s30, %s46
      %p48 = scmp.eq.s32.totalorder %s22, 0
      %p49 = por %p47, %p48
      %s50 = ssub.s32 %s16, %s23
      %p51 = scmp.eq.s32.totalorder %s50, 0
      %s53 = sadd.s32 %s52, 1
      %s54 = scalar_select %p51, %s52, %s53
      %p57 = pneg %p51
      %p58 = scmp.eq.s32.totalorder %s16, 1
      %p59 = por %p57, %p58
      %p60 = scmp.ne.s32.totalorder %s52, %s55
      %p61 = scmp.eq.s32.totalorder %s16, 0
      %p62 = por %p60, %p61
      %p63 = scmp.ne.s32.totalorder %s52, %s55
      %p64 = scmp.eq.s32.totalorder %s21, 1
      %p65 = por %p63, %p64
      %p66 = scmp.ne.s32.totalorder %s55, %s56
      %p67 = scmp.eq.s32.totalorder %s21, 0
      %p68 = por %p66, %p67
      %p69 = scmp.ne.s32.totalorder %s55, %s56
      %p70 = scmp.eq.s32.totalorder %s22, 1
      %p71 = por %p69, %p70
      %p73 = scmp.ne.s32.totalorder %s56, %s72
      %p74 = scmp.eq.s32.totalorder %s22, 0
      %p75 = por %p73, %p74
      %s77 = sadd.s32 %s76, 1
      %p80 = scmp.eq.s32.totalorder %s16, 1
      %p81 = scmp.ne.s32.totalorder %s76, %s78
      %p82 = scmp.eq.s32.totalorder %s16, 0
      %p83 = por %p81, %p82
      %p84 = scmp.ne.s32.totalorder %s76, %s78
      %p85 = scmp.eq.s32.totalorder %s21, 1
      %p86 = por %p84, %p85
      %p87 = scmp.ne.s32.totalorder %s78, %s79
      %p88 = scmp.eq.s32.totalorder %s21, 0
      %p89 = por %p87, %p88
      %p90 = scmp.ne.s32.totalorder %s78, %s79
      %p91 = scmp.eq.s32.totalorder %s22, 1
      %p92 = por %p90, %p91
      %p94 = scmp.ne.s32.totalorder %s79, %s93
      %p95 = scmp.eq.s32.totalorder %s22, 0
      %p96 = por %p94, %p95
      %s98 = sadd.s32 %s97, 1
      %p101 = scmp.eq.s32.totalorder %s16, 1
      %p102 = scmp.ne.s32.totalorder %s97, %s99
      %p103 = scmp.eq.s32.totalorder %s16, 0
      %p104 = por %p102, %p103
      %p105 = scmp.ne.s32.totalorder %s97, %s99
      %p106 = scmp.eq.s32.totalorder %s21, 1
      %p107 = por %p105, %p106
      %p108 = scmp.ne.s32.totalorder %s99, %s100
      %p109 = scmp.eq.s32.totalorder %s21, 0
      %p110 = por %p108, %p109
      %p111 = scmp.ne.s32.totalorder %s99, %s100
      %p112 = scmp.eq.s32.totalorder %s22, 1
      %p113 = por %p111, %p112
      %p115 = scmp.ne.s32.totalorder %s100, %s114
      %p116 = scmp.eq.s32.totalorder %s22, 0
      %p117 = por %p115, %p116
      %s119 = sadd.s32 %s118, 1
      %p122 = scmp.eq.s32.totalorder %s16, 1
      %p123 = scmp.ne.s32.totalorder %s118, %s120
      %p124 = scmp.eq.s32.totalorder %s16, 0
      %p125 = por %p123, %p124
      %p126 = scmp.ne.s32.totalorder %s118, %s120
      %p127 = scmp.eq.s32.totalorder %s21, 1
      %p128 = por %p126, %p127
      %p129 = scmp.ne.s32.totalorder %s120, %s121
      %p130 = scmp.eq.s32.totalorder %s21, 0
      %p131 = por %p129, %p130
      %p132 = scmp.ne.s32.totalorder %s120, %s121
      %p133 = scmp.eq.s32.totalorder %s22, 1
      %p134 = por %p132, %p133
      %p136 = scmp.ne.s32.totalorder %s121, %s135
      %p137 = scmp.eq.s32.totalorder %s22, 0
      %p138 = por %p136, %p137
      %s140 = sadd.s32 %s139, 1
      %p143 = scmp.eq.s32.totalorder %s16, 1
      %p144 = scmp.ne.s32.totalorder %s139, %s141
      %p145 = scmp.eq.s32.totalorder %s16, 0
      %p146 = por %p144, %p145
      %p147 = scmp.ne.s32.totalorder %s139, %s141
      %p148 = scmp.eq.s32.totalorder %s21, 1
      %p149 = por %p147, %p148
      %p150 = scmp.ne.s32.totalorder %s141, %s142
      %p151 = scmp.eq.s32.totalorder %s21, 0
      %p152 = por %p150, %p151
      %p153 = scmp.ne.s32.totalorder %s141, %s142
      %p154 = scmp.eq.s32.totalorder %s22, 1
      %p155 = por %p153, %p154
      %p157 = scmp.ne.s32.totalorder %s142, %s156
      %p158 = scmp.eq.s32.totalorder %s22, 0
      %p159 = por %p157, %p158
      %s160 = ssub.s32 %s16, %s23
      %p161 = scmp.eq.s32.totalorder %s160, 0
      %s163 = sadd.s32 %s162, 1
      %s164 = scalar_select %p161, %s162, %s163
      %p167 = pneg %p161
      %p168 = scmp.eq.s32.totalorder %s16, 1
      %p169 = por %p167, %p168
      %p170 = scmp.ne.s32.totalorder %s162, %s165
      %p171 = scmp.eq.s32.totalorder %s16, 0
      %p172 = por %p170, %p171
      %p173 = scmp.ne.s32.totalorder %s162, %s165
      %p174 = scmp.eq.s32.totalorder %s21, 1
      %p175 = por %p173, %p174
      %p176 = scmp.ne.s32.totalorder %s165, %s166
      %p177 = scmp.eq.s32.totalorder %s21, 0
      %p178 = por %p176, %p177
      %p179 = scmp.ne.s32.totalorder %s165, %s166
      %p180 = scmp.eq.s32.totalorder %s22, 1
      %p181 = por %p179, %p180
      %p183 = scmp.ne.s32.totalorder %s166, %s182
      %p184 = scmp.eq.s32.totalorder %s22, 0
      %p185 = por %p183, %p184
      %p186 = scmp.le.s32.totalorder 1, %s16
      %p187 = scmp.lt.s32.totalorder %s16, 3
      %p188 = pnand %p186, %p187
      %p189 = pneg %p188
      // Predicated region
      $region9: #{tpu_custom_call.1} parent=5 // pred_check
        _
      $region10: #{tpu_custom_call.1} parent=5 // pred_check_branch
        %191 = sbr.rel (%p188) target = $region12
      $region11: #{tpu_custom_call.1} parent=5 // pred_region
        %s192 = ssub.s32 %s16, 1
        // Predicated region
        $region13: #{tpu_custom_call.1} parent=11 // pred_check
          %p193 = pneg %p89
        $region14: #{tpu_custom_call.1} parent=11 // pred_check_branch
          %195 = sbr.rel (%p193) target = $region16
        $region15: #{tpu_custom_call.1} parent=11 // pred_region
          _
        $region16: #{tpu_custom_call.1} parent=11 // pred_fallthru
          _
        // Predicated region
        $region17: #{tpu_custom_call.1} parent=11 // pred_check
          %p196 = pneg %p110
        $region18: #{tpu_custom_call.1} parent=11 // pred_check_branch
          %198 = sbr.rel (%p196) target = $region20
        $region19: #{tpu_custom_call.1} parent=11 // pred_region
          _
        $region20: #{tpu_custom_call.1} parent=11 // pred_fallthru
          _
        // Predicated region
        $region21: #{tpu_custom_call.1} parent=11 // pred_check
          %p199 = pneg %p131
        $region22: #{tpu_custom_call.1} parent=11 // pred_check_branch
          %201 = sbr.rel (%p199) target = $region24
        $region23: #{tpu_custom_call.1} parent=11 // pred_region
          _
        $region24: #{tpu_custom_call.1} parent=11 // pred_fallthru
          _
        // Predicated region
        $region25: #{tpu_custom_call.1} parent=11 // pred_check
          %p202 = pneg %p152
        $region26: #{tpu_custom_call.1} parent=11 // pred_check_branch
          %204 = sbr.rel (%p202) target = $region28
        $region27: #{tpu_custom_call.1} parent=11 // pred_region
          %s206 = ssub.s32 16, 16
          %207 = vsyncadd [#allocation4], %s206
          %s209 = sshll.u32 %s5, 4
          %s210 = int_to_ptr.vmem [resolvable:$true] %s209
          %212 = dma.vmem_to_smem %s210, 16, [#allocation2], [#allocation4]
        $region28: #{tpu_custom_call.1} parent=11 // pred_fallthru
          _
      $region12: #{tpu_custom_call.1} parent=5 // pred_fallthru
        _
      %p213 = scmp.lt.s32.totalorder %s16, 2
      // Predicated region
      $region29: #{tpu_custom_call.1} parent=5 // pred_check
        %p214 = pneg %p213
      $region30: #{tpu_custom_call.1} parent=5 // pred_check_branch
        %216 = sbr.rel (%p214) target = $region32
      $region31: #{tpu_custom_call.1} parent=5 // pred_region
        // Predicated region
        $region33: #{tpu_custom_call.1} parent=31 // pred_check
          %p217 = pneg %p36
        $region34: #{tpu_custom_call.1} parent=31 // pred_check_branch
          %219 = sbr.rel (%p217) target = $region36
        $region35: #{tpu_custom_call.1} parent=31 // pred_region
          %s220 = smul.u32 16, %s16
          %p221 = scmp.lt.s32.totalorder %s220, 31
          %s222 = scalar_select %p221, %s220, 31
          %s223 = smul.addr %s222, 8
          %s224 = scalar_lea.vmem %s0, %s223
          %s225 = smul.u32 16, %s16
        $region36: #{tpu_custom_call.1} parent=31 // pred_fallthru
          _
        // Predicated region
        $region37: #{tpu_custom_call.1} parent=31 // pred_check
          %p226 = pneg %p62
        $region38: #{tpu_custom_call.1} parent=31 // pred_check_branch
          %228 = sbr.rel (%p226) target = $region40
        $region39: #{tpu_custom_call.1} parent=31 // pred_region
          %s229 = smul.u32 16, %s16
          %p230 = scmp.lt.s32.totalorder %s229, 31
          %s231 = scalar_select %p230, %s229, 31
          %s232 = smul.addr %s231, 8
          %s233 = scalar_lea.vmem %s1, %s232
          %s234 = smul.u32 16, %s16
        $region40: #{tpu_custom_call.1} parent=31 // pred_fallthru
          _
      $region32: #{tpu_custom_call.1} parent=5 // pred_fallthru
        _
      %p235 = scmp.le.s32.totalorder 1, %s16
      %p236 = scmp.lt.s32.totalorder %s16, 3
      %p237 = pnand %p235, %p236
      %p238 = pneg %p237
      // Predicated region
      $region41: #{tpu_custom_call.1} parent=5 // pred_check
        _
      $region42: #{tpu_custom_call.1} parent=5 // pred_check_branch
        %240 = sbr.rel (%p237) target = $region44
      $region43: #{tpu_custom_call.1} parent=5 // pred_region
        %s241 = ssub.s32 %s16, 1
        // Predicated region
        $region45: #{tpu_custom_call.1} parent=43 // pred_check
          %p242 = pneg %p152
        $region46: #{tpu_custom_call.1} parent=43 // pred_check_branch
          %244 = sbr.rel (%p242) target = $region48
        $region47: #{tpu_custom_call.1} parent=43 // pred_region
          %245 = dma.done [#allocation4], 16
        $region48: #{tpu_custom_call.1} parent=43 // pred_fallthru
          _
        %246 = sfence
        %s247 = smul.u32 16, %s21
        %p248 = scmp.lt.s32.totalorder %s247, 31
        %s249 = scalar_select %p248, %s247, 31
        %s250 = smul.addr %s249, 8
        %s251 = scalar_lea.vmem %s0, %s250
        %p252 = pneg %p42
        %p253 = pneg %p39
        %s254 = smul.u32 16, %s21
        %p255 = scmp.lt.s32.totalorder %s254, 31
        %s256 = scalar_select %p255, %s254, 31
        %s257 = smul.addr %s256, 8
        %s258 = scalar_lea.vmem %s1, %s257
        %p259 = pneg %p68
        %p260 = pneg %p65
        %p261 = pneg %p89
        %p262 = pneg %p86
        %p263 = pneg %p110
        %p264 = pneg %p107
        %p265 = pneg %p131
        %p266 = pneg %p128
        %p267 = pneg %p152
        %p268 = pneg %p149
        %p269 = pneg %p178
        %p270 = pneg %p175
        %s271 = sand.u32 %s165, 1
        %s272 = scalar_lea.sflag [#allocation3], %s271
        %s273 = sand.u32 %s165, 1
        %s274 = smul.addr %s273, 128
        %s275 = scalar_lea.vmem [#allocation5], %s274
        %s276 = smul.u32 16, %s21
        %p277 = scmp.lt.s32.totalorder %s276, 31
        %s278 = scalar_select %p277, %s276, 31
        %s279 = smul.addr %s278, 8
        %s280 = scalar_lea.vmem %s0, %s279
        %s281 = smul.u32 16, %s21
        %s282 = smul.u32 16, %s21
        %p283 = scmp.lt.s32.totalorder %s282, 31
        %s284 = scalar_select %p283, %s282, 31
        %s285 = smul.addr %s284, 8
        %s286 = scalar_lea.vmem %s1, %s285
        %s287 = smul.u32 16, %s21
        %s288 = smul.u32 16, %s21
        %v289 = vld [vmem:[%s280] sm:$0xff]
        %v290 = vld [vmem:[%s280 + $0x8] sm:$0xff]
        %v291 = vld [vmem:[%s280 + $0x10] sm:$0xff]
        %v292 = vld [vmem:[%s280 + $0x18] sm:$0xff]
        %v293 = vld [vmem:[%s280 + $0x20] sm:$0xff]
        %v294 = vld [vmem:[%s280 + $0x28] sm:$0xff]
        %v295 = vld [vmem:[%s280 + $0x30] sm:$0xff]
        %v296 = vld [vmem:[%s280 + $0x38] sm:$0xff]
        %v297 = vld [vmem:[%s280 + $0x40] sm:$0xff]
        %v298 = vld [vmem:[%s280 + $0x48] sm:$0xff]
        %v299 = vld [vmem:[%s280 + $0x50] sm:$0xff]
        %v300 = vld [vmem:[%s280 + $0x58] sm:$0xff]
        %v301 = vld [vmem:[%s280 + $0x60] sm:$0xff]
        %v302 = vld [vmem:[%s280 + $0x68] sm:$0xff]
        %v303 = vld [vmem:[%s280 + $0x70] sm:$0xff]
        %v304 = vld [vmem:[%s280 + $0x78] sm:$0xff]
        %v305 = vld [vmem:[%s2] sm:$0xff]
        %v306 = vld [vmem:[%s2 + $0x8] sm:$0xff]
        %v307 = vld [vmem:[%s2 + $0x10] sm:$0xff]
        %v308 = vld [vmem:[%s2 + $0x18] sm:$0xff]
        %v309 = vld [vmem:[%s3] sm:$0x1]
        %v311 = vlaneseq
        %v312 = vshrl.u32 %v311, 7
        %v313 = vsub.s32 0, %v312
        %v314 = vrot.slane %v309, %v313
        %vm316 = vcmask 261120
        %v318 = vsel %vm316, %v289, 0
        %v321 = vsel %vm316, %v290, 0
        %v324 = vsel %vm316, %v291, 0
        %v327 = vsel %vm316, %v292, 0
        %v330 = vsel %vm316, %v293, 0
        %v333 = vsel %vm316, %v294, 0
        %v336 = vsel %vm316, %v295, 0
        %v339 = vsel %vm316, %v296, 0
        %v342 = vsel %vm316, %v297, 0
        %v345 = vsel %vm316, %v298, 0
        %v348 = vsel %vm316, %v299, 0
        %v351 = vsel %vm316, %v300, 0
        %v354 = vsel %vm316, %v301, 0
        %v357 = vsel %vm316, %v302, 0
        %v360 = vsel %vm316, %v303, 0
        %v363 = vsel %vm316, %v304, 0
        %365 = vmatprep.subr.mxu0 0.0
        %366 = vmatpush1.msra.mxu0 %v305
        %367 = vmatprep.subr.mxu0 0.0
        %368 = vmatpush1.msra.mxu0 %v306
        %369 = vmatprep.subr.mxu0 0.0
        %370 = vmatpush1.msra.mxu0 %v307
        %371 = vmatprep.subr.mxu0 0.0
        %372 = vmatpush1.msra.mxu0 %v308
        %373 = vmatprep.subr.mxu0 0.0
        %374 = vmatpush1.msra.mxu0 0.0
        %375 = vmatprep.subr.mxu0 0.0
        %376 = vmatpush1.msra.mxu0 0.0
        %377 = vmatprep.subr.mxu0 0.0
        %378 = vmatpush1.msra.mxu0 0.0
        %379 = vmatprep.subr.mxu0 0.0
        %380 = vmatpush1.msra.mxu0 0.0
        %381 = vmatprep.subr.mxu0 0.0
        %382 = vmatpush1.msra.mxu0 0.0
        %383 = vmatprep.subr.mxu0 0.0
        %384 = vmatpush1.msra.mxu0 0.0
        %385 = vmatprep.subr.mxu0 0.0
        %386 = vmatpush1.msra.mxu0 0.0
        %387 = vmatprep.subr.mxu0 0.0
        %388 = vmatpush1.msra.mxu0 0.0
        %389 = vmatprep.subr.mxu0 0.0
        %390 = vmatpush1.msra.mxu0 0.0
        %391 = vmatprep.subr.mxu0 0.0
        %392 = vmatpush1.msra.mxu0 0.0
        %393 = vmatprep.subr.mxu0 0.0
        %394 = vmatpush1.msra.mxu0 0.0
        %395 = vmatprep.subr.mxu0 0.0
        %396 = vmatpush1.msra.mxu0 0.0
        %397 = vmatprep.subr.mxu0 0.0
        %398 = vmatpush1.msra.mxu0 0.0
        %399 = vmatprep.subr.mxu0 0.0
        %400 = vmatpush1.msra.mxu0 0.0
        %401 = vmatprep.subr.mxu0 0.0
        %402 = vmatpush1.msra.mxu0 0.0
        %403 = vmatprep.subr.mxu0 0.0
        %404 = vmatpush1.msra.mxu0 0.0
        %405 = vmatprep.subr.mxu0 0.0
        %406 = vmatpush1.msra.mxu0 0.0
        %407 = vmatprep.subr.mxu0 0.0
        %408 = vmatpush1.msra.mxu0 0.0
        %409 = vmatprep.subr.mxu0 0.0
        %410 = vmatpush1.msra.mxu0 0.0
        %411 = vmatprep.subr.mxu0 0.0
        %412 = vmatpush1.msra.mxu0 0.0
        %413 = vmatprep.subr.mxu0 0.0
        %414 = vmatpush1.msra.mxu0 0.0
        %415 = vmatprep.subr.mxu0 0.0
        %416 = vmatpush1.msra.mxu0 0.0
        %417 = vmatprep.subr.mxu0 0.0
        %418 = vmatpush1.msra.mxu0 0.0
        %419 = vmatprep.subr.mxu0 0.0
        %420 = vmatpush1.msra.mxu0 0.0
        %421 = vmatprep.subr.mxu0 0.0
        %422 = vmatpush1.msra.mxu0 0.0
        %423 = vmatprep.subr.mxu0 0.0
        %424 = vmatpush1.msra.mxu0 0.0
        %425 = vmatprep.subr.mxu0 0.0
        %426 = vmatpush1.msra.mxu0 0.0
        %427 = vmatprep.subr.mxu0 0.0
        %428 = vmatpush1.msra.mxu0 0.0
        %429 = vmatprep.mubr.f32.mxu0 0.0
        %430 = vmatmul.mubr.f32.gmra.mrb[0].mxu0 %v318
        %v431 = vpop.f32.mrb[0].mxu0
        %v432 = vadd.f32 %v314, %v431
        %v433 = vpop.f32.mrb[0].mxu0
        %434 = vmatprep.mubr.f32.mxu0 0.0
        %435 = vmatmul.mubr.f32.gmra.mrb[0].mxu0 %v321
        %v436 = vpop.f32.mrb[0].mxu0
        %v437 = vadd.f32 %v314, %v436
        %v438 = vpop.f32.mrb[0].mxu0
        %439 = vmatprep.mubr.f32.mxu0 0.0
        %440 = vmatmul.mubr.f32.gmra.mrb[0].mxu0 %v324
        %v441 = vpop.f32.mrb[0].mxu0
        %v442 = vadd.f32 %v314, %v441
        %v443 = vpop.f32.mrb[0].mxu0
        %444 = vmatprep.mubr.f32.mxu0 0.0
        %445 = vmatmul.mubr.f32.gmra.mrb[0].mxu0 %v327
        %v446 = vpop.f32.mrb[0].mxu0
        %v447 = vadd.f32 %v314, %v446
        %v448 = vpop.f32.mrb[0].mxu0
        %449 = vmatprep.mubr.f32.mxu0 0.0
        %450 = vmatmul.mubr.f32.gmra.mrb[0].mxu0 %v330
        %v451 = vpop.f32.mrb[0].mxu0
        %v452 = vadd.f32 %v314, %v451
        %v453 = vpop.f32.mrb[0].mxu0
        %454 = vmatprep.mubr.f32.mxu0 0.0
        %455 = vmatmul.mubr.f32.gmra.mrb[0].mxu0 %v333
        %v456 = vpop.f32.mrb[0].mxu0
        %v457 = vadd.f32 %v314, %v456
        %v458 = vpop.f32.mrb[0].mxu0
        %459 = vmatprep.mubr.f32.mxu0 0.0
        %460 = vmatmul.mubr.f32.gmra.mrb[0].mxu0 %v336
        %v461 = vpop.f32.mrb[0].mxu0
        %v462 = vadd.f32 %v314, %v461
        %v463 = vpop.f32.mrb[0].mxu0
        %464 = vmatprep.mubr.f32.mxu0 0.0
        %465 = vmatmul.mubr.f32.gmra.mrb[0].mxu0 %v339
        %v466 = vpop.f32.mrb[0].mxu0
        %v467 = vadd.f32 %v314, %v466
        %v468 = vpop.f32.mrb[0].mxu0
        %469 = vmatprep.mubr.f32.mxu0 0.0
        %470 = vmatmul.mubr.f32.gmra.mrb[0].mxu0 %v342
        %v471 = vpop.f32.mrb[0].mxu0
        %v472 = vadd.f32 %v314, %v471
        %v473 = vpop.f32.mrb[0].mxu0
        %474 = vmatprep.mubr.f32.mxu0 0.0
        %475 = vmatmul.mubr.f32.gmra.mrb[0].mxu0 %v345
        %v476 = vpop.f32.mrb[0].mxu0
        %v477 = vadd.f32 %v314, %v476
        %v478 = vpop.f32.mrb[0].mxu0
        %479 = vmatprep.mubr.f32.mxu0 0.0
        %480 = vmatmul.mubr.f32.gmra.mrb[0].mxu0 %v348
        %v481 = vpop.f32.mrb[0].mxu0
        %v482 = vadd.f32 %v314, %v481
        %v483 = vpop.f32.mrb[0].mxu0
        %484 = vmatprep.mubr.f32.mxu0 0.0
        %485 = vmatmul.mubr.f32.gmra.mrb[0].mxu0 %v351
        %v486 = vpop.f32.mrb[0].mxu0
        %v487 = vadd.f32 %v314, %v486
        %v488 = vpop.f32.mrb[0].mxu0
        %489 = vmatprep.mubr.f32.mxu0 0.0
        %490 = vmatmul.mubr.f32.gmra.mrb[0].mxu0 %v354
        %v491 = vpop.f32.mrb[0].mxu0
        %v492 = vadd.f32 %v314, %v491
        %v493 = vpop.f32.mrb[0].mxu0
        %494 = vmatprep.mubr.f32.mxu0 0.0
        %495 = vmatmul.mubr.f32.gmra.mrb[0].mxu0 %v357
        %v496 = vpop.f32.mrb[0].mxu0
        %v497 = vadd.f32 %v314, %v496
        %v498 = vpop.f32.mrb[0].mxu0
        %499 = vmatprep.mubr.f32.mxu0 0.0
        %500 = vmatmul.mubr.f32.gmra.mrb[0].mxu0 %v360
        %v501 = vpop.f32.mrb[0].mxu0
        %v502 = vadd.f32 %v314, %v501
        %v503 = vpop.f32.mrb[0].mxu0
        %504 = vmatprep.mubr.f32.mxu0 0.0
        %505 = vmatmul.mubr.f32.gmra.mrb[0].mxu0 %v363
        %v506 = vpop.f32.mrb[0].mxu0
        %v507 = vadd.f32 %v314, %v506
        %v508 = vpop.f32.mrb[0].mxu0
        %509 = vdwg.mxu0
        %v510 = vmax.f32 %v432, 0.0
        %v511 = vmax.f32 %v437, 0.0
        %v512 = vmax.f32 %v442, 0.0
        %v513 = vmax.f32 %v447, 0.0
        %v514 = vmax.f32 %v452, 0.0
        %v515 = vmax.f32 %v457, 0.0
        %v516 = vmax.f32 %v462, 0.0
        %v517 = vmax.f32 %v467, 0.0
        %v518 = vmax.f32 %v472, 0.0
        %v519 = vmax.f32 %v477, 0.0
        %v520 = vmax.f32 %v482, 0.0
        %v521 = vmax.f32 %v487, 0.0
        %v522 = vmax.f32 %v492, 0.0
        %v523 = vmax.f32 %v497, 0.0
        %v524 = vmax.f32 %v502, 0.0
        %v525 = vmax.f32 %v507, 0.0
        %v526 = vld [vmem:[%s4] sm:$0xff]
        %v527 = vld [vmem:[%s4 + $0x8] sm:$0xff]
        %v528 = vld [vmem:[%s4 + $0x10] sm:$0xff]
        %v529 = vld [vmem:[%s4 + $0x18] sm:$0xff]
        %v530 = vld [vmem:[%s4 + $0x20] sm:$0xff]
        %v531 = vld [vmem:[%s4 + $0x28] sm:$0xff]
        %v532 = vld [vmem:[%s4 + $0x30] sm:$0xff]
        %v533 = vld [vmem:[%s4 + $0x38] sm:$0xff]
        %vm534 = vcmask 523264
        %v536 = vsel %vm534, %v510, 0
        %v539 = vsel %vm534, %v511, 0
        %v542 = vsel %vm534, %v512, 0
        %v545 = vsel %vm534, %v513, 0
        %v548 = vsel %vm534, %v514, 0
        %v551 = vsel %vm534, %v515, 0
        %v554 = vsel %vm534, %v516, 0
        %v557 = vsel %vm534, %v517, 0
        %v560 = vsel %vm534, %v518, 0
        %v563 = vsel %vm534, %v519, 0
        %v566 = vsel %vm534, %v520, 0
        %v569 = vsel %vm534, %v521, 0
        %v572 = vsel %vm534, %v522, 0
        %v575 = vsel %vm534, %v523, 0
        %v578 = vsel %vm534, %v524, 0
        %v581 = vsel %vm534, %v525, 0
        %583 = vmatprep.subr.mxu0 0.0
        %584 = vmatpush1.msra.mxu0 %v526
        %585 = vmatprep.subr.mxu0 0.0
        %586 = vmatpush1.msra.mxu0 %v527
        %587 = vmatprep.subr.mxu0 0.0
        %588 = vmatpush1.msra.mxu0 %v528
        %589 = vmatprep.subr.mxu0 0.0
        %590 = vmatpush1.msra.mxu0 %v529
        %591 = vmatprep.subr.mxu0 0.0
        %592 = vmatpush1.msra.mxu0 %v530
        %593 = vmatprep.subr.mxu0 0.0
        %594 = vmatpush1.msra.mxu0 %v531
        %595 = vmatprep.subr.mxu0 0.0
        %596 = vmatpush1.msra.mxu0 %v532
        %597 = vmatprep.subr.mxu0 0.0
        %598 = vmatpush1.msra.mxu0 %v533
        %599 = vmatprep.subr.mxu0 0.0
        %600 = vmatpush1.msra.mxu0 0.0
        %601 = vmatprep.subr.mxu0 0.0
        %602 = vmatpush1.msra.mxu0 0.0
        %603 = vmatprep.subr.mxu0 0.0
        %604 = vmatpush1.msra.mxu0 0.0
        %605 = vmatprep.subr.mxu0 0.0
        %606 = vmatpush1.msra.mxu0 0.0
        %607 = vmatprep.subr.mxu0 0.0
        %608 = vmatpush1.msra.mxu0 0.0
        %609 = vmatprep.subr.mxu0 0.0
        %610 = vmatpush1.msra.mxu0 0.0
        %611 = vmatprep.subr.mxu0 0.0
        %612 = vmatpush1.msra.mxu0 0.0
        %613 = vmatprep.subr.mxu0 0.0
        %614 = vmatpush1.msra.mxu0 0.0
        %615 = vmatprep.subr.mxu0 0.0
        %616 = vmatpush1.msra.mxu0 0.0
        %617 = vmatprep.subr.mxu0 0.0
        %618 = vmatpush1.msra.mxu0 0.0
        %619 = vmatprep.subr.mxu0 0.0
        %620 = vmatpush1.msra.mxu0 0.0
        %621 = vmatprep.subr.mxu0 0.0
        %622 = vmatpush1.msra.mxu0 0.0
        %623 = vmatprep.subr.mxu0 0.0
        %624 = vmatpush1.msra.mxu0 0.0
        %625 = vmatprep.subr.mxu0 0.0
        %626 = vmatpush1.msra.mxu0 0.0
        %627 = vmatprep.subr.mxu0 0.0
        %628 = vmatpush1.msra.mxu0 0.0
        %629 = vmatprep.subr.mxu0 0.0
        %630 = vmatpush1.msra.mxu0 0.0
        %631 = vmatprep.subr.mxu0 0.0
        %632 = vmatpush1.msra.mxu0 0.0
        %633 = vmatprep.subr.mxu0 0.0
        %634 = vmatpush1.msra.mxu0 0.0
        %635 = vmatprep.subr.mxu0 0.0
        %636 = vmatpush1.msra.mxu0 0.0
        %637 = vmatprep.subr.mxu0 0.0
        %638 = vmatpush1.msra.mxu0 0.0
        %639 = vmatprep.subr.mxu0 0.0
        %640 = vmatpush1.msra.mxu0 0.0
        %641 = vmatprep.subr.mxu0 0.0
        %642 = vmatpush1.msra.mxu0 0.0
        %643 = vmatprep.subr.mxu0 0.0
        %644 = vmatpush1.msra.mxu0 0.0
        %645 = vmatprep.subr.mxu0 0.0
        %646 = vmatpush1.msra.mxu0 0.0
        %647 = vmatprep.mubr.f32.mxu0 0.0
        %648 = vmatmul.mubr.f32.gmra.mrb[0].mxu0 %v536
        %v649 = vpop.f32.mrb[0].mxu0
        %v650 = vadd.f32 0.0, %v649
        %v651 = vpop.f32.mrb[0].mxu0
        %652 = vmatprep.mubr.f32.mxu0 0.0
        %653 = vmatmul.mubr.f32.gmra.mrb[0].mxu0 %v539
        %v654 = vpop.f32.mrb[0].mxu0
        %v655 = vadd.f32 0.0, %v654
        %v656 = vpop.f32.mrb[0].mxu0
        %657 = vmatprep.mubr.f32.mxu0 0.0
        %658 = vmatmul.mubr.f32.gmra.mrb[0].mxu0 %v542
        %v659 = vpop.f32.mrb[0].mxu0
        %v660 = vadd.f32 0.0, %v659
        %v661 = vpop.f32.mrb[0].mxu0
        %662 = vmatprep.mubr.f32.mxu0 0.0
        %663 = vmatmul.mubr.f32.gmra.mrb[0].mxu0 %v545
        %v664 = vpop.f32.mrb[0].mxu0
        %v665 = vadd.f32 0.0, %v664
        %v666 = vpop.f32.mrb[0].mxu0
        %667 = vmatprep.mubr.f32.mxu0 0.0
        %668 = vmatmul.mubr.f32.gmra.mrb[0].mxu0 %v548
        %v669 = vpop.f32.mrb[0].mxu0
        %v670 = vadd.f32 0.0, %v669
        %v671 = vpop.f32.mrb[0].mxu0
        %672 = vmatprep.mubr.f32.mxu0 0.0
        %673 = vmatmul.mubr.f32.gmra.mrb[0].mxu0 %v551
        %v674 = vpop.f32.mrb[0].mxu0
        %v675 = vadd.f32 0.0, %v674
        %v676 = vpop.f32.mrb[0].mxu0
        %677 = vmatprep.mubr.f32.mxu0 0.0
        %678 = vmatmul.mubr.f32.gmra.mrb[0].mxu0 %v554
        %v679 = vpop.f32.mrb[0].mxu0
        %v680 = vadd.f32 0.0, %v679
        %v681 = vpop.f32.mrb[0].mxu0
        %682 = vmatprep.mubr.f32.mxu0 0.0
        %683 = vmatmul.mubr.f32.gmra.mrb[0].mxu0 %v557
        %v684 = vpop.f32.mrb[0].mxu0
        %v685 = vadd.f32 0.0, %v684
        %v686 = vpop.f32.mrb[0].mxu0
        %687 = vmatprep.mubr.f32.mxu0 0.0
        %688 = vmatmul.mubr.f32.gmra.mrb[0].mxu0 %v560
        %v689 = vpop.f32.mrb[0].mxu0
        %v690 = vadd.f32 0.0, %v689
        %v691 = vpop.f32.mrb[0].mxu0
        %692 = vmatprep.mubr.f32.mxu0 0.0
        %693 = vmatmul.mubr.f32.gmra.mrb[0].mxu0 %v563
        %v694 = vpop.f32.mrb[0].mxu0
        %v695 = vadd.f32 0.0, %v694
        %v696 = vpop.f32.mrb[0].mxu0
        %697 = vmatprep.mubr.f32.mxu0 0.0
        %698 = vmatmul.mubr.f32.gmra.mrb[0].mxu0 %v566
        %v699 = vpop.f32.mrb[0].mxu0
        %v700 = vadd.f32 0.0, %v699
        %v701 = vpop.f32.mrb[0].mxu0
        %702 = vmatprep.mubr.f32.mxu0 0.0
        %703 = vmatmul.mubr.f32.gmra.mrb[0].mxu0 %v569
        %v704 = vpop.f32.mrb[0].mxu0
        %v705 = vadd.f32 0.0, %v704
        %v706 = vpop.f32.mrb[0].mxu0
        %707 = vmatprep.mubr.f32.mxu0 0.0
        %708 = vmatmul.mubr.f32.gmra.mrb[0].mxu0 %v572
        %v709 = vpop.f32.mrb[0].mxu0
        %v710 = vadd.f32 0.0, %v709
        %v711 = vpop.f32.mrb[0].mxu0
        %712 = vmatprep.mubr.f32.mxu0 0.0
        %713 = vmatmul.mubr.f32.gmra.mrb[0].mxu0 %v575
        %v714 = vpop.f32.mrb[0].mxu0
        %v715 = vadd.f32 0.0, %v714
        %v716 = vpop.f32.mrb[0].mxu0
        %717 = vmatprep.mubr.f32.mxu0 0.0
        %718 = vmatmul.mubr.f32.gmra.mrb[0].mxu0 %v578
        %v719 = vpop.f32.mrb[0].mxu0
        %v720 = vadd.f32 0.0, %v719
        %v721 = vpop.f32.mrb[0].mxu0
        %722 = vmatprep.mubr.f32.mxu0 0.0
        %723 = vmatmul.mubr.f32.gmra.mrb[0].mxu0 %v581
        %v724 = vpop.f32.mrb[0].mxu0
        %v725 = vadd.f32 0.0, %v724
        %v726 = vpop.f32.mrb[0].mxu0
        %727 = vdwg.mxu0
        %s728 = sld [smem:[#allocation2]]
        %v729 = vstv %s728
        %v730 = vadd.f32 %v650, %v729
        %v731 = vadd.f32 %v655, %v729
        %v732 = vadd.f32 %v660, %v729
        %v733 = vadd.f32 %v665, %v729
        %v734 = vadd.f32 %v670, %v729
        %v735 = vadd.f32 %v675, %v729
        %v736 = vadd.f32 %v680, %v729
        %v737 = vadd.f32 %v685, %v729
        %v738 = vadd.f32 %v690, %v729
        %v739 = vadd.f32 %v695, %v729
        %v740 = vadd.f32 %v700, %v729
        %v741 = vadd.f32 %v705, %v729
        %v742 = vadd.f32 %v710, %v729
        %v743 = vadd.f32 %v715, %v729
        %v744 = vadd.f32 %v720, %v729
        %v745 = vadd.f32 %v725, %v729
        %s746 = sld [smem:[#allocation2 + $0x1]]
        %v747 = vstv %s746
        %v748 = vadd.f32 %v650, %v747
        %v749 = vadd.f32 %v655, %v747
        %v750 = vadd.f32 %v660, %v747
        %v751 = vadd.f32 %v665, %v747
        %v752 = vadd.f32 %v670, %v747
        %v753 = vadd.f32 %v675, %v747
        %v754 = vadd.f32 %v680, %v747
        %v755 = vadd.f32 %v685, %v747
        %v756 = vadd.f32 %v690, %v747
        %v757 = vadd.f32 %v695, %v747
        %v758 = vadd.f32 %v700, %v747
        %v759 = vadd.f32 %v705, %v747
        %v760 = vadd.f32 %v710, %v747
        %v761 = vadd.f32 %v715, %v747
        %v762 = vadd.f32 %v720, %v747
        %v763 = vadd.f32 %v725, %v747
        %v764 = vld [vmem:[%s286] sm:$0xff]
        %v765 = vld [vmem:[%s286 + $0x8] sm:$0xff]
        %v766 = vld [vmem:[%s286 + $0x10] sm:$0xff]
        %v767 = vld [vmem:[%s286 + $0x18] sm:$0xff]
        %v768 = vld [vmem:[%s286 + $0x20] sm:$0xff]
        %v769 = vld [vmem:[%s286 + $0x28] sm:$0xff]
        %v770 = vld [vmem:[%s286 + $0x30] sm:$0xff]
        %v771 = vld [vmem:[%s286 + $0x38] sm:$0xff]
        %v772 = vld [vmem:[%s286 + $0x40] sm:$0xff]
        %v773 = vld [vmem:[%s286 + $0x48] sm:$0xff]
        %v774 = vld [vmem:[%s286 + $0x50] sm:$0xff]
        %v775 = vld [vmem:[%s286 + $0x58] sm:$0xff]
        %v776 = vld [vmem:[%s286 + $0x60] sm:$0xff]
        %v777 = vld [vmem:[%s286 + $0x68] sm:$0xff]
        %v778 = vld [vmem:[%s286 + $0x70] sm:$0xff]
        %v779 = vld [vmem:[%s286 + $0x78] sm:$0xff]
        %v780 = vmul.f32 %v748, 0.5
        %v781 = vmul.f32 %v749, 0.5
        %v782 = vmul.f32 %v750, 0.5
        %v783 = vmul.f32 %v751, 0.5
        %v784 = vmul.f32 %v752, 0.5
        %v785 = vmul.f32 %v753, 0.5
        %v786 = vmul.f32 %v754, 0.5
        %v787 = vmul.f32 %v755, 0.5
        %v788 = vmul.f32 %v756, 0.5
        %v789 = vmul.f32 %v757, 0.5
        %v790 = vmul.f32 %v758, 0.5
        %v791 = vmul.f32 %v759, 0.5
        %v792 = vmul.f32 %v760, 0.5
        %v793 = vmul.f32 %v761, 0.5
        %v794 = vmul.f32 %v762, 0.5
        %v795 = vmul.f32 %v763, 0.5
        %v796 = vmul.f32 %v780, 1.442695
        %v797 = vpow.pop %v796
        %v798 = vmul.f32 %v781, 1.442695
        %v799 = vpow.pop %v798
        %v800 = vmul.f32 %v782, 1.442695
        %v801 = vpow.pop %v800
        %v802 = vmul.f32 %v783, 1.442695
        %v803 = vpow.pop %v802
        %v804 = vmul.f32 %v784, 1.442695
        %v805 = vpow.pop %v804
        %v806 = vmul.f32 %v785, 1.442695
        %v807 = vpow.pop %v806
        %v808 = vmul.f32 %v786, 1.442695
        %v809 = vpow.pop %v808
        %v810 = vmul.f32 %v787, 1.442695
        %v811 = vpow.pop %v810
        %v812 = vmul.f32 %v788, 1.442695
        %v813 = vpow.pop %v812
        %v814 = vmul.f32 %v789, 1.442695
        %v815 = vpow.pop %v814
        %v816 = vmul.f32 %v790, 1.442695
        %v817 = vpow.pop %v816
        %v818 = vmul.f32 %v791, 1.442695
        %v819 = vpow.pop %v818
        %v820 = vmul.f32 %v792, 1.442695
        %v821 = vpow.pop %v820
        %v822 = vmul.f32 %v793, 1.442695
        %v823 = vpow.pop %v822
        %v824 = vmul.f32 %v794, 1.442695
        %v825 = vpow.pop %v824
        %v826 = vmul.f32 %v795, 1.442695
        %v827 = vpow.pop %v826
        %829 = vset.pattern.permute.xlu0 1
        %830 = vperm.xlu0 %829, %v797
        %v831 = vpop.permute.xlu0 %830
        %834 = vset.pattern.permute.xlu0 1
        %835 = vperm.xlu0 %834, %v799
        %v836 = vpop.permute.xlu0 %835
        %839 = vset.pattern.permute.xlu0 1
        %840 = vperm.xlu0 %839, %v801
        %v841 = vpop.permute.xlu0 %840
        %844 = vset.pattern.permute.xlu0 1
        %845 = vperm.xlu0 %844, %v803
        %v846 = vpop.permute.xlu0 %845
        %849 = vset.pattern.permute.xlu0 1
        %850 = vperm.xlu0 %849, %v805
        %v851 = vpop.permute.xlu0 %850
        %854 = vset.pattern.permute.xlu0 1
        %855 = vperm.xlu0 %854, %v807
        %v856 = vpop.permute.xlu0 %855
        %859 = vset.pattern.permute.xlu0 1
        %860 = vperm.xlu0 %859, %v809
        %v861 = vpop.permute.xlu0 %860
        %864 = vset.pattern.permute.xlu0 1
        %865 = vperm.xlu0 %864, %v811
        %v866 = vpop.permute.xlu0 %865
        %869 = vset.pattern.permute.xlu0 1
        %870 = vperm.xlu0 %869, %v813
        %v871 = vpop.permute.xlu0 %870
        %874 = vset.pattern.permute.xlu0 1
        %875 = vperm.xlu0 %874, %v815
        %v876 = vpop.permute.xlu0 %875
        %879 = vset.pattern.permute.xlu0 1
        %880 = vperm.xlu0 %879, %v817
        %v881 = vpop.permute.xlu0 %880
        %884 = vset.pattern.permute.xlu0 1
        %885 = vperm.xlu0 %884, %v819
        %v886 = vpop.permute.xlu0 %885
        %889 = vset.pattern.permute.xlu0 1
        %890 = vperm.xlu0 %889, %v821
        %v891 = vpop.permute.xlu0 %890
        %894 = vset.pattern.permute.xlu0 1
        %895 = vperm.xlu0 %894, %v823
        %v896 = vpop.permute.xlu0 %895
        %899 = vset.pattern.permute.xlu0 1
        %900 = vperm.xlu0 %899, %v825
        %v901 = vpop.permute.xlu0 %900
        %904 = vset.pattern.permute.xlu0 1
        %905 = vperm.xlu0 %904, %v827
        %v906 = vpop.permute.xlu0 %905
        %v908 = vmul.f32 %v764, %v831
        %v909 = vmul.f32 %v765, %v836
        %v910 = vmul.f32 %v766, %v841
        %v911 = vmul.f32 %v767, %v846
        %v912 = vmul.f32 %v768, %v851
        %v913 = vmul.f32 %v769, %v856
        %v914 = vmul.f32 %v770, %v861
        %v915 = vmul.f32 %v771, %v866
        %v916 = vmul.f32 %v772, %v871
        %v917 = vmul.f32 %v773, %v876
        %v918 = vmul.f32 %v774, %v881
        %v919 = vmul.f32 %v775, %v886
        %v920 = vmul.f32 %v776, %v891
        %v921 = vmul.f32 %v777, %v896
        %v922 = vmul.f32 %v778, %v901
        %v923 = vmul.f32 %v779, %v906
        %925 = vset.pattern.permute.xlu0 0
        %926 = vperm.xlu0 %925, %v730
        %v927 = vpop.permute.xlu0 %926
        %930 = vset.pattern.permute.xlu0 0
        %931 = vperm.xlu0 %930, %v731
        %v932 = vpop.permute.xlu0 %931
        %935 = vset.pattern.permute.xlu0 0
        %936 = vperm.xlu0 %935, %v732
        %v937 = vpop.permute.xlu0 %936
        %940 = vset.pattern.permute.xlu0 0
        %941 = vperm.xlu0 %940, %v733
        %v942 = vpop.permute.xlu0 %941
        %945 = vset.pattern.permute.xlu0 0
        %946 = vperm.xlu0 %945, %v734
        %v947 = vpop.permute.xlu0 %946
        %950 = vset.pattern.permute.xlu0 0
        %951 = vperm.xlu0 %950, %v735
        %v952 = vpop.permute.xlu0 %951
        %955 = vset.pattern.permute.xlu0 0
        %956 = vperm.xlu0 %955, %v736
        %v957 = vpop.permute.xlu0 %956
        %960 = vset.pattern.permute.xlu0 0
        %961 = vperm.xlu0 %960, %v737
        %v962 = vpop.permute.xlu0 %961
        %965 = vset.pattern.permute.xlu0 0
        %966 = vperm.xlu0 %965, %v738
        %v967 = vpop.permute.xlu0 %966
        %970 = vset.pattern.permute.xlu0 0
        %971 = vperm.xlu0 %970, %v739
        %v972 = vpop.permute.xlu0 %971
        %975 = vset.pattern.permute.xlu0 0
        %976 = vperm.xlu0 %975, %v740
        %v977 = vpop.permute.xlu0 %976
        %980 = vset.pattern.permute.xlu0 0
        %981 = vperm.xlu0 %980, %v741
        %v982 = vpop.permute.xlu0 %981
        %985 = vset.pattern.permute.xlu0 0
        %986 = vperm.xlu0 %985, %v742
        %v987 = vpop.permute.xlu0 %986
        %990 = vset.pattern.permute.xlu0 0
        %991 = vperm.xlu0 %990, %v743
        %v992 = vpop.permute.xlu0 %991
        %995 = vset.pattern.permute.xlu0 0
        %996 = vperm.xlu0 %995, %v744
        %v997 = vpop.permute.xlu0 %996
        %1000 = vset.pattern.permute.xlu0 0
        %1001 = vperm.xlu0 %1000, %v745
        %v1002 = vpop.permute.xlu0 %1001
        %v1004 = vadd.f32 %v927, %v908
        %v1005 = vadd.f32 %v932, %v909
        %v1006 = vadd.f32 %v937, %v910
        %v1007 = vadd.f32 %v942, %v911
        %v1008 = vadd.f32 %v947, %v912
        %v1009 = vadd.f32 %v952, %v913
        %v1010 = vadd.f32 %v957, %v914
        %v1011 = vadd.f32 %v962, %v915
        %v1012 = vadd.f32 %v967, %v916
        %v1013 = vadd.f32 %v972, %v917
        %v1014 = vadd.f32 %v977, %v918
        %v1015 = vadd.f32 %v982, %v919
        %v1016 = vadd.f32 %v987, %v920
        %v1017 = vadd.f32 %v992, %v921
        %v1018 = vadd.f32 %v997, %v922
        %v1019 = vadd.f32 %v1002, %v923
        %1020 = vst [vmem:[%s275] sm:$0xff] %v1004
        %1021 = vst [vmem:[%s275 + $0x8] sm:$0xff] %v1005
        %1022 = vst [vmem:[%s275 + $0x10] sm:$0xff] %v1006
        %1023 = vst [vmem:[%s275 + $0x18] sm:$0xff] %v1007
        %1024 = vst [vmem:[%s275 + $0x20] sm:$0xff] %v1008
        %1025 = vst [vmem:[%s275 + $0x28] sm:$0xff] %v1009
        %1026 = vst [vmem:[%s275 + $0x30] sm:$0xff] %v1010
        %1027 = vst [vmem:[%s275 + $0x38] sm:$0xff] %v1011
        %1028 = vst [vmem:[%s275 + $0x40] sm:$0xff] %v1012
        %1029 = vst [vmem:[%s275 + $0x48] sm:$0xff] %v1013
        %1030 = vst [vmem:[%s275 + $0x50] sm:$0xff] %v1014
        %1031 = vst [vmem:[%s275 + $0x58] sm:$0xff] %v1015
        %1032 = vst [vmem:[%s275 + $0x60] sm:$0xff] %v1016
        %1033 = vst [vmem:[%s275 + $0x68] sm:$0xff] %v1017
        %1034 = vst [vmem:[%s275 + $0x70] sm:$0xff] %v1018
        %1035 = vst [vmem:[%s275 + $0x78] sm:$0xff] %v1019
        %s1036 = sand.u32 %s165, 1
        %s1037 = scalar_lea.sflag [#allocation3], %s1036
        %s1038 = sand.u32 %s165, 1
        %s1039 = smul.addr %s1038, 128
        %s1040 = scalar_lea.vmem [#allocation5], %s1039
        // Predicated region
        $region49: #{tpu_custom_call.1} parent=43 // pred_check
          %p1041 = pneg %p175
        $region50: #{tpu_custom_call.1} parent=43 // pred_check_branch
          %1043 = sbr.rel (%p1041) target = $region52
        $region51: #{tpu_custom_call.1} parent=43 // pred_region
          %s1044 = smul.u32 16, %s21
          %s1046 = ssub.s32 2048, 2048
          %1047 = vsyncadd %s1037, %s1046
          %s1048 = smul.addr %s1044, 128
          %s1049 = scalar_lea.hbm %s6, %s1048
          %s1050 = sshll.u32 %s1040, 4
          %s1051 = int_to_ptr.vmem [resolvable:$true] %s1050
          %1056 = dma.vmem_to_hbm [thread:$0]  %s1051, 2048, %s1049, %s1037, 128, 128, 8
        $region52: #{tpu_custom_call.1} parent=43 // pred_fallthru
          _
      $region44: #{tpu_custom_call.1} parent=5 // pred_fallthru
        _
      %p1057 = scmp.le.s32.totalorder 2, %s16
      // Predicated region
      $region53: #{tpu_custom_call.1} parent=5 // pred_check
        %p1058 = pneg %p1057
      $region54: #{tpu_custom_call.1} parent=5 // pred_check_branch
        %1060 = sbr.rel (%p1058) target = $region56
      $region55: #{tpu_custom_call.1} parent=5 // pred_region
        %s1061 = ssub.s32 %s16, 2
        // Predicated region
        $region57: #{tpu_custom_call.1} parent=55 // pred_check
          %p1062 = pneg %p181
        $region58: #{tpu_custom_call.1} parent=55 // pred_check_branch
          %1064 = sbr.rel (%p1062) target = $region60
        $region59: #{tpu_custom_call.1} parent=55 // pred_region
          %s1065 = sand.u32 %s166, 1
          %s1066 = scalar_lea.sflag [#allocation3], %s1065
          %s1067 = sand.u32 %s166, 1
          %s1068 = smul.addr %s1067, 128
          %s1069 = scalar_lea.vmem [#allocation5], %s1068
          %1070 = dma.done %s1066, 2048
        $region60: #{tpu_custom_call.1} parent=55 // pred_fallthru
          _
      $region56: #{tpu_custom_call.1} parent=5 // pred_fallthru
        _
    $region6: #{tpu_custom_call.1} parent=1 // loop_footer
      %s20 = sadd.s32 1, %s16
    $region7: #{tpu_custom_call.1} parent=1 // loop_footer_branch
      %15 = sbr.rel target = $region3
    $region8: #{tpu_custom_call.1} parent=1 // loop_exit
      _
    %1071 = vsyncpa [#allocation3], 1
    %s1072 = scalar_lea.sflag [#allocation3], 1
    %1073 = vsyncpa %s1072, 1
    %1074 = vsyncpa [#allocation4], 1
    %s1075 = scalar_lea.sflag [#allocation4], 1
    %1076 = vsyncpa %s1075, 1

</llo_original>
